<compile_context>
chip_gen: v7x
topology: tpu7x:2x2x1
jax: 0.10.0
libtpu: 0.0.40
codegen_flags: <defaults>
</compile_context>

<pallas_src>
import jax
import jax.numpy as jnp
from jax import lax
from jax.experimental import pallas as pl
from jax.experimental.pallas import tpu as pltpu

ENCODED_DIM = 256
HIDDEN = 64
N_VERIFY = 2         # verify head: real/fake
N_CLASSIFY = 10      # classify head: digit class
NEG_SLOPE = 0.1      # LeakyReLU negative slope
FUSED_HIDDEN = 2 * HIDDEN          # 128 = [verify hidden | classify hidden]
SLAB_WIDTH = 128                   # lane-dense intermediate logits slab


def _round_up(n, m):
    return ((n + m - 1) // m) * m


def _leaky_relu(x, slope):
    return jnp.where(x > 0, x, slope * x)


def discriminator_kernel(x_ref, w1_ref, b1_ref, w2_ref, b2_ref,
                         out_v_ref, out_c_ref):
    # self.activate = LeakyReLU(0.1) on the encoder output (f32 VPU path).
    x = _leaky_relu(x_ref[...].astype(jnp.float32), NEG_SLOPE)

    # Fused first layer of both heads: one (TILE_B,256) @ (256,128) MXU pass.
    h = jnp.dot(x.astype(jnp.bfloat16), w1_ref[...],
                preferred_element_type=jnp.float32) + b1_ref[...]
    h = _leaky_relu(h, NEG_SLOPE)   # norm='instance' -> Identity, nothing else

    # Fused second layer via block-diagonal (128,128) weight:
    #   lanes 0:2  = verify logits, lanes 2:12 = classify logits, rest padding.
    z = jnp.dot(h.astype(jnp.bfloat16), w2_ref[...],
                preferred_element_type=jnp.float32) + b2_ref[...]

    # Fused per-head log_softmax: one exp pass over the slab, masked reductions.
    col = lax.broadcasted_iota(jnp.int32, z.shape, 1)
    mask_v = col < N_VERIFY
    mask_c = (col >= N_VERIFY) & (col < N_VERIFY + N_CLASSIFY)
    neg_big = jnp.float32(-1e30)

    m_v = jnp.max(jnp.where(mask_v, z, neg_big), axis=-1, keepdims=True)
    m_c = jnp.max(jnp.where(mask_c, z, neg_big), axis=-1, keepdims=True)
    s = z - jnp.where(mask_v, m_v, m_c)          # combined shift
    e = jnp.exp(s)                               # single EUP pass
    sum_v = jnp.sum(jnp.where(mask_v, e, 0.0), axis=-1, keepdims=True)
    sum_c = jnp.sum(jnp.where(mask_c, e, 0.0), axis=-1, keepdims=True)
    out = s - jnp.where(mask_v, jnp.log(sum_v), jnp.log(sum_c))

    # Narrow outputs: validity = lanes 0:2, label = lanes 2:12.
    out_v_ref[...] = out[:, :N_VERIFY].astype(out_v_ref.dtype)
    out_c_ref[...] = out[:, N_VERIFY:N_VERIFY + N_CLASSIFY].astype(out_c_ref.dtype)


def _pack_params(params):
    """Fuse the per-head PyTorch-style Linear params into two wide weights."""
    w1v, b1v, w2v, b2v, w1c, b1c, w2c, b2c = params
    w1 = jnp.concatenate([w1v, w1c], axis=1).astype(jnp.bfloat16)   # (256, 128)
    b1 = jnp.concatenate([b1v, b1c], axis=1).astype(jnp.float32)    # (1, 128)

    w2 = jnp.zeros((FUSED_HIDDEN, SLAB_WIDTH), jnp.float32)
    w2 = w2.at[:HIDDEN, :N_VERIFY].set(w2v)
    w2 = w2.at[HIDDEN:, N_VERIFY:N_VERIFY + N_CLASSIFY].set(w2c)
    w2 = w2.astype(jnp.bfloat16)                                    # (128, 128)

    b2 = jnp.zeros((1, SLAB_WIDTH), jnp.float32)
    b2 = b2.at[:, :N_VERIFY].set(b2v)
    b2 = b2.at[:, N_VERIFY:N_VERIFY + N_CLASSIFY].set(b2c)          # (1, 128)
    return w1, b1, w2, b2


def _choose_tile_b(B, requested, x_dtype):
    """Pick a batch tile: big (amortize ~0.35us/step) but >=2-4 grid steps."""
    # Sublane alignment: 8 rows for 32-bit inputs, 16 for 16-bit (bf16 packing).
    align = 8 if jnp.dtype(x_dtype).itemsize >= 4 else 16
    b_pad = _round_up(B, align)
    tile = min(_round_up(max(align, requested), align), b_pad)
    # v7x: guarantee >=2 grid steps (two TensorCores), ideally 4 so each TC
    # keeps its double-buffer busy.  Neutral on v5e/v6e (single TC).
    if b_pad >= 4 * align:
        tile = min(tile, _round_up(pl.cdiv(b_pad, 4), align))
    elif b_pad >= 2 * align:
        tile = min(tile, _round_up(pl.cdiv(b_pad, 2), align))
    return tile


def discriminator_forward(x, params, *, tile_b=2048):
    """x: (B, ENCODED_DIM) f32 (or bf16). Returns (validity (B,2), label (B,10))."""
    B = x.shape[0]
    w1, b1, w2, b2 = _pack_params(params)

    tile_b = _choose_tile_b(B, tile_b, x.dtype)
    grid = (pl.cdiv(B, tile_b),)

    validity, label = pl.pallas_call(
        discriminator_kernel,
        grid=grid,
        out_shape=(jax.ShapeDtypeStruct((B, N_VERIFY), jnp.float32),
                   jax.ShapeDtypeStruct((B, N_CLASSIFY), jnp.float32)),
        in_specs=[
            # x tiled over the batch (double-buffered by the pipeline)
            pl.BlockSpec((tile_b, ENCODED_DIM), lambda i: (i, 0)),
            # packed weights / biases: constant index_map -> VMEM-resident
            pl.BlockSpec((ENCODED_DIM, FUSED_HIDDEN), lambda i: (0, 0)),
            pl.BlockSpec((1, FUSED_HIDDEN), lambda i: (0, 0)),
            pl.BlockSpec((FUSED_HIDDEN, SLAB_WIDTH), lambda i: (0, 0)),
            pl.BlockSpec((1, SLAB_WIDTH), lambda i: (0, 0)),
        ],
        out_specs=[
            # last block dim == full array dim, so the narrow tiles are legal
            pl.BlockSpec((tile_b, N_VERIFY), lambda i: (i, 0)),
            pl.BlockSpec((tile_b, N_CLASSIFY), lambda i: (i, 0)),
        ],
        compiler_params=pltpu.CompilerParams(
            dimension_semantics=("parallel",)),  # v7x: shard batch over 2 TCs
    )(x, w1, b1, w2, b2)

    return validity, label


def init_params(key):
    """Deterministic PyTorch-style Linear init: U(-1/sqrt(fan_in), 1/sqrt(fan_in))."""
    def linear(k, fan_in, fan_out):
        kw, kb = jax.random.split(k)
        bound = 1.0 / jnp.sqrt(fan_in)
        w = jax.random.uniform(kw, (fan_in, fan_out), jnp.float32, -bound, bound)
        b = jax.random.uniform(kb, (1, fan_out), jnp.float32, -bound, bound)
        return w, b

    k1, k2, k3, k4 = jax.random.split(key, 4)
    w1v, b1v = linear(k1, ENCODED_DIM, HIDDEN)
    w2v, b2v = linear(k2, HIDDEN, N_VERIFY)
    w1c, b1c = linear(k3, ENCODED_DIM, HIDDEN)
    w2c, b2c = linear(k4, HIDDEN, N_CLASSIFY)
    return (w1v, b1v, w2v, b2v, w1c, b1c, w2c, b2c)


def _log_softmax(z):
    m = jnp.max(z, axis=-1, keepdims=True)
    s = z - m
    return s - jnp.log(jnp.sum(jnp.exp(s), axis=-1, keepdims=True))


def reference_forward(x, params):
    """Pure-JAX reference with the same bf16 MXU-operand quantization."""
    w1v, b1v, w2v, b2v, w1c, b1c, w2c, b2c = params

    def bf(a):
        return a.astype(jnp.bfloat16).astype(jnp.float32)

    x = _leaky_relu(x.astype(jnp.float32), NEG_SLOPE)
    hv = _leaky_relu(bf(x) @ bf(w1v) + b1v, NEG_SLOPE)
    zv = bf(hv) @ bf(w2v) + b2v
    hc = _leaky_relu(bf(x) @ bf(w1c) + b1c, NEG_SLOPE)
    zc = bf(hc) @ bf(w2c) + b2c
    return _log_softmax(zv), _log_softmax(zc)


if __name__ == "__main__":
    key = jax.random.PRNGKey(0)
    k_params, k_x = jax.random.split(key)

    B = 64
    params = init_params(k_params)
    x = jax.random.normal(k_x, (B, ENCODED_DIM), jnp.float32)

    # tile selection gives tile_b=16, grid=(4,): exercises the batch pipeline
    # and the dual-TC "parallel" sharding path on v7x.
    validity, label = discriminator_forward(x, params)
    validity = jax.block_until_ready(validity)
    label = jax.block_until_ready(label)

    # correctness check against pure-JAX reference
    ref_v, ref_l = reference_forward(x, params)
    assert validity.shape == (B, N_VERIFY) and label.shape == (B, N_CLASSIFY)
    assert jnp.allclose(validity, ref_v, atol=2e-3, rtol=2e-3)
    assert jnp.allclose(label, ref_l, atol=2e-3, rtol=2e-3)

    print("KERNEL_OK")
</pallas_src>

<mosaic_0001>
module attributes {stable_mosaic.version = 11 : i64} {
  func.func @discriminator_kernel(%arg0: i32, %arg1: memref<16x256xf32, #tpu.memory_space<vmem>>, %arg2: memref<256x128xbf16, #tpu.memory_space<vmem>>, %arg3: memref<1x128xf32, #tpu.memory_space<vmem>>, %arg4: memref<128x128xbf16, #tpu.memory_space<vmem>>, %arg5: memref<1x128xf32, #tpu.memory_space<vmem>>, %arg6: memref<16x2xf32, #tpu.memory_space<vmem>>, %arg7: memref<16x10xf32, #tpu.memory_space<vmem>>) attributes {dimension_semantics = [#tpu.dimension_semantics<parallel>], iteration_bounds = array<i64: 4>, scalar_prefetch = 0 : i64, scratch_operands = 0 : i64, tpu.core_type = #tpu.core_type<tc>, window_params = [{transform_indices = @transform_0, window_bounds = array<i64: 16, 256>}, {pipeline_mode = #tpu.pipeline_mode<synchronous>, transform_indices = @transform_1, window_bounds = array<i64: 256, 128>}, {pipeline_mode = #tpu.pipeline_mode<synchronous>, transform_indices = @transform_2, window_bounds = array<i64: 1, 128>}, {pipeline_mode = #tpu.pipeline_mode<synchronous>, transform_indices = @transform_3, window_bounds = array<i64: 128, 128>}, {pipeline_mode = #tpu.pipeline_mode<synchronous>, transform_indices = @transform_4, window_bounds = array<i64: 1, 128>}, {transform_indices = @transform_5, window_bounds = array<i64: 16, 2>}, {transform_indices = @transform_6, window_bounds = array<i64: 16, 10>}]} {
    %c0 = arith.constant 0 : index
    %c0_0 = arith.constant 0 : index
    %0 = vector.load %arg1[%c0, %c0_0] : memref<16x256xf32, #tpu.memory_space<vmem>>, vector<16x256xf32>
    %cst = arith.constant 0.000000e+00 : f32
    %1 = vector.broadcast %cst : f32 to vector<16x256xf32>
    %2 = arith.cmpf ogt, %0, %1 : vector<16x256xf32>
    %cst_1 = arith.constant 1.000000e-01 : f32
    %3 = vector.broadcast %cst_1 : f32 to vector<16x256xf32>
    %4 = arith.mulf %3, %0 : vector<16x256xf32>
    %5 = arith.select %2, %0, %4 : vector<16x256xi1>, vector<16x256xf32>
    %6 = arith.truncf %5 : vector<16x256xf32> to vector<16x256xbf16>
    %c0_2 = arith.constant 0 : index
    %c0_3 = arith.constant 0 : index
    %7 = vector.load %arg2[%c0_2, %c0_3] : memref<256x128xbf16, #tpu.memory_space<vmem>>, vector<256x128xbf16>
    %cst_4 = arith.constant dense<0.000000e+00> : vector<16x128xf32>
    %8 = tpu.matmul %6, %7, %cst_4 {dimension_numbers = #tpu.dot_dimension_numbers<[1], [0], [0], [1], [0, 0, 1, 1], [], []>} : vector<16x256xbf16>, vector<256x128xbf16>, vector<16x128xf32> -> vector<16x128xf32>
    %c0_5 = arith.constant 0 : index
    %c0_6 = arith.constant 0 : index
    %9 = vector.load %arg3[%c0_5, %c0_6] : memref<1x128xf32, #tpu.memory_space<vmem>>, vector<1x128xf32>
    %10 = vector.broadcast %9 : vector<1x128xf32> to vector<16x128xf32>
    %11 = arith.addf %8, %10 : vector<16x128xf32>
    %cst_7 = arith.constant 0.000000e+00 : f32
    %12 = vector.broadcast %cst_7 : f32 to vector<16x128xf32>
    %13 = arith.cmpf ogt, %11, %12 : vector<16x128xf32>
    %cst_8 = arith.constant 1.000000e-01 : f32
    %14 = vector.broadcast %cst_8 : f32 to vector<16x128xf32>
    %15 = arith.mulf %14, %11 : vector<16x128xf32>
    %16 = arith.select %13, %11, %15 : vector<16x128xi1>, vector<16x128xf32>
    %17 = arith.truncf %16 : vector<16x128xf32> to vector<16x128xbf16>
    %c0_9 = arith.constant 0 : index
    %c0_10 = arith.constant 0 : index
    %18 = vector.load %arg4[%c0_9, %c0_10] : memref<128x128xbf16, #tpu.memory_space<vmem>>, vector<128x128xbf16>
    %cst_11 = arith.constant dense<0.000000e+00> : vector<16x128xf32>
    %19 = tpu.matmul %17, %18, %cst_11 {dimension_numbers = #tpu.dot_dimension_numbers<[1], [0], [0], [1], [0, 0, 1, 1], [], []>} : vector<16x128xbf16>, vector<128x128xbf16>, vector<16x128xf32> -> vector<16x128xf32>
    %c0_12 = arith.constant 0 : index
    %c0_13 = arith.constant 0 : index
    %20 = vector.load %arg5[%c0_12, %c0_13] : memref<1x128xf32, #tpu.memory_space<vmem>>, vector<1x128xf32>
    %21 = vector.broadcast %20 : vector<1x128xf32> to vector<16x128xf32>
    %22 = arith.addf %19, %21 : vector<16x128xf32>
    %23 = tpu.iota {dimensions = array<i32: 1>} : vector<16x128xi32>
    %c2_i32 = arith.constant 2 : i32
    %24 = vector.broadcast %c2_i32 : i32 to vector<16x128xi32>
    %25 = arith.cmpi slt, %23, %24 : vector<16x128xi32>
    %c2_i32_14 = arith.constant 2 : i32
    %26 = vector.broadcast %c2_i32_14 : i32 to vector<16x128xi32>
    %27 = arith.cmpi sge, %23, %26 : vector<16x128xi32>
    %c12_i32 = arith.constant 12 : i32
    %28 = vector.broadcast %c12_i32 : i32 to vector<16x128xi32>
    %29 = arith.cmpi slt, %23, %28 : vector<16x128xi32>
    %30 = arith.andi %27, %29 : vector<16x128xi1>
    %cst_15 = arith.constant -1.000000e+30 : f32
    %31 = vector.broadcast %cst_15 : f32 to vector<16x128xf32>
    %32 = arith.select %25, %22, %31 : vector<16x128xi1>, vector<16x128xf32>
    %cst_16 = arith.constant dense<0xFF800000> : vector<16xf32>
    %33 = vector.multi_reduction <maximumf>, %32, %cst_16 [1] : vector<16x128xf32> to vector<16xf32>
    %34 = vector.shape_cast %33 : vector<16xf32> to vector<16x1xf32>
    %cst_17 = arith.constant -1.000000e+30 : f32
    %35 = vector.broadcast %cst_17 : f32 to vector<16x128xf32>
    %36 = arith.select %30, %22, %35 : vector<16x128xi1>, vector<16x128xf32>
    %cst_18 = arith.constant dense<0xFF800000> : vector<16xf32>
    %37 = vector.multi_reduction <maximumf>, %36, %cst_18 [1] : vector<16x128xf32> to vector<16xf32>
    %38 = vector.shape_cast %37 : vector<16xf32> to vector<16x1xf32>
    %39 = vector.shape_cast %34 : vector<16x1xf32> to vector<16x1xf32>
    %40 = vector.broadcast %39 : vector<16x1xf32> to vector<16x128xf32>
    %41 = vector.shape_cast %38 : vector<16x1xf32> to vector<16x1xf32>
    %42 = vector.broadcast %41 : vector<16x1xf32> to vector<16x128xf32>
    %43 = arith.select %25, %40, %42 : vector<16x128xi1>, vector<16x128xf32>
    %44 = arith.subf %22, %43 : vector<16x128xf32>
    %45 = math.exp %44 : vector<16x128xf32>
    %cst_19 = arith.constant 0.000000e+00 : f32
    %46 = vector.broadcast %cst_19 : f32 to vector<16x128xf32>
    %47 = arith.select %25, %45, %46 : vector<16x128xi1>, vector<16x128xf32>
    %cst_20 = arith.constant dense<0.000000e+00> : vector<16xf32>
    %48 = vector.multi_reduction <add>, %47, %cst_20 [1] : vector<16x128xf32> to vector<16xf32>
    %49 = vector.shape_cast %48 : vector<16xf32> to vector<16x1xf32>
    %cst_21 = arith.constant 0.000000e+00 : f32
    %50 = vector.broadcast %cst_21 : f32 to vector<16x128xf32>
    %51 = arith.select %30, %45, %50 : vector<16x128xi1>, vector<16x128xf32>
    %cst_22 = arith.constant dense<0.000000e+00> : vector<16xf32>
    %52 = vector.multi_reduction <add>, %51, %cst_22 [1] : vector<16x128xf32> to vector<16xf32>
    %53 = vector.shape_cast %52 : vector<16xf32> to vector<16x1xf32>
    %54 = math.log %49 : vector<16x1xf32>
    %55 = math.log %53 : vector<16x1xf32>
    %56 = vector.shape_cast %54 : vector<16x1xf32> to vector<16x1xf32>
    %57 = vector.broadcast %56 : vector<16x1xf32> to vector<16x128xf32>
    %58 = vector.shape_cast %55 : vector<16x1xf32> to vector<16x1xf32>
    %59 = vector.broadcast %58 : vector<16x1xf32> to vector<16x128xf32>
    %60 = arith.select %25, %57, %59 : vector<16x128xi1>, vector<16x128xf32>
    %61 = arith.subf %44, %60 : vector<16x128xf32>
    %62 = vector.extract_strided_slice %61 {offsets = [0, 0], sizes = [16, 2], strides = [1, 1]} : vector<16x128xf32> to vector<16x2xf32>
    %c0_23 = arith.constant 0 : index
    %c0_24 = arith.constant 0 : index
    %63 = vector.load %arg6[%c0_23, %c0_24] : memref<16x2xf32, #tpu.memory_space<vmem>>, vector<16x2xf32>
    tpu.vector_store %arg6[%c0_23, %c0_24], %62 {strides = array<i32>} : memref<16x2xf32, #tpu.memory_space<vmem>>, vector<16x2xf32>,
    %64 = vector.extract_strided_slice %61 {offsets = [0, 2], sizes = [16, 10], strides = [1, 1]} : vector<16x128xf32> to vector<16x10xf32>
    %c0_25 = arith.constant 0 : index
    %c0_26 = arith.constant 0 : index
    %65 = vector.load %arg7[%c0_25, %c0_26] : memref<16x10xf32, #tpu.memory_space<vmem>>, vector<16x10xf32>
    tpu.vector_store %arg7[%c0_25, %c0_26], %64 {strides = array<i32>} : memref<16x10xf32, #tpu.memory_space<vmem>>, vector<16x10xf32>,
    return
  }
  func.func @transform_0(%arg0: i32) -> (i32, i32) {
    %c0_i32 = arith.constant 0 : i32
    %c0_i32_0 = arith.constant 0 : i32
    return %arg0, %c0_i32 : i32, i32
  }
  func.func @transform_1(%arg0: i32) -> (i32, i32) {
    %c0_i32 = arith.constant 0 : i32
    %c0_i32_0 = arith.constant 0 : i32
    %c0_i32_1 = arith.constant 0 : i32
    return %c0_i32, %c0_i32_0 : i32, i32
  }
  func.func @transform_2(%arg0: i32) -> (i32, i32) {
    %c0_i32 = arith.constant 0 : i32
    %c0_i32_0 = arith.constant 0 : i32
    %c0_i32_1 = arith.constant 0 : i32
    return %c0_i32, %c0_i32_0 : i32, i32
  }
  func.func @transform_3(%arg0: i32) -> (i32, i32) {
    %c0_i32 = arith.constant 0 : i32
    %c0_i32_0 = arith.constant 0 : i32
    %c0_i32_1 = arith.constant 0 : i32
    return %c0_i32, %c0_i32_0 : i32, i32
  }
  func.func @transform_4(%arg0: i32) -> (i32, i32) {
    %c0_i32 = arith.constant 0 : i32
    %c0_i32_0 = arith.constant 0 : i32
    %c0_i32_1 = arith.constant 0 : i32
    return %c0_i32, %c0_i32_0 : i32, i32
  }
  func.func @transform_5(%arg0: i32) -> (i32, i32) {
    %c0_i32 = arith.constant 0 : i32
    %c0_i32_0 = arith.constant 0 : i32
    return %arg0, %c0_i32 : i32, i32
  }
  func.func @transform_6(%arg0: i32) -> (i32, i32) {
    %c0_i32 = arith.constant 0 : i32
    %c0_i32_0 = arith.constant 0 : i32
    return %arg0, %c0_i32 : i32, i32
  }
}

</mosaic_0001>

<llo_original>
// kernel: tpu_custom_call.1
$region0: #{tpu_custom_call.1}
  #allocation0 [shape = 'u32[]', space=smem, size = 0x4, offset = 0x4, fixed_abs, tag = 'smem constant byte address 0x4 - core index']
  #allocation1 [shape = 'u32[144,128]{1,0:T(1,128)}', space=vmem, size = 0x12000, scoped, tag = 'internal scratch']
  %s0 = inlined_call_operand.hbm [shape: f32[64,256], index: 0, kind: input, shape index: {}]
  %s1 = inlined_call_operand.hbm [shape: bf16[256,128], index: 1, kind: input, shape index: {}]
  %s2 = inlined_call_operand.vmem [shape: f32[1,128], index: 2, kind: input, shape index: {}]
  %s3 = inlined_call_operand.hbm [shape: bf16[128,128], index: 3, kind: input, shape index: {}]
  %s4 = inlined_call_operand.vmem [shape: f32[1,128], index: 4, kind: input, shape index: {}]
  %s5 = inlined_call_operand.vmem [shape: f32[64,2], index: 5, kind: output, shape index: {0}]
  %s6 = inlined_call_operand.vmem [shape: f32[64,10], index: 6, kind: output, shape index: {1}]
  %7 = xla_tuple %s5, %s6
  %s8 = sld [smem:[#allocation0]]
  $region73: #{tpu_custom_call.1} parent=0
    _
  %s10 = ssub.s32 1, %s8
  %s11 = scalar_select 0, %s10, %s8
  $region1: #{tpu_custom_call.1} parent=0
    #allocation2 [shape = 'u8[32768]{0}', space=vmem, size = 0x8000, scoped, tag = 'input window, operand 0']
    #allocation3 [shape = 's32[2]{0}', space=sflag, size = 0x8, scoped, tag = 'scoped memory for tpu_custom_call.1']
    #allocation4 [shape = 'u8[65536]{0}', space=vmem, size = 0x10000, scoped, tag = 'input window, operand 1, single buffered']
    #allocation5 [shape = 's32[1]{0}', space=sflag, size = 0x4, scoped, tag = 'scoped memory for tpu_custom_call.1']
    #allocation6 [shape = 'u8[32768]{0}', space=vmem, size = 0x8000, scoped, tag = 'input window, operand 3, single buffered']
    %12 = vsyncpa [#allocation3], 0
    %s13 = scalar_lea.sflag [#allocation3], 1
    %14 = vsyncpa %s13, 0
    %15 = vsyncpa [#allocation5], 0
    loop: start=0, step=1, limit=6
    $region2: #{tpu_custom_call.1} parent=1 // loop_pre_header
      _
    $region3: #{tpu_custom_call.1} parent=1 // loop_header
      %s17 = sphi 0, %s21
      %p18 = scmp.ge.s32.totalorder %s17, 6
      %s27 = sphi 0, %s29
      %s30 = sphi 0, %s27
      %s31 = sphi 0, %s30
      %s47 = sphi 0, %s31
      %s51 = sphi 0, %s51
      %s53 = sphi 0, %s51
      %s54 = sphi 0, %s53
      %s68 = sphi 0, %s54
      %s72 = sphi 0, %s72
      %s74 = sphi 0, %s72
      %s75 = sphi 0, %s74
      %s89 = sphi 0, %s75
      %s93 = sphi 0, %s93
      %s95 = sphi 0, %s93
      %s96 = sphi 0, %s95
      %s110 = sphi 0, %s96
      %s114 = sphi 0, %s114
      %s116 = sphi 0, %s114
      %s117 = sphi 0, %s116
      %s131 = sphi 0, %s117
      %s137 = sphi 0, %s139
      %s140 = sphi 0, %s137
      %s141 = sphi 0, %s140
      %s157 = sphi 0, %s141
      %s163 = sphi 0, %s165
      %s166 = sphi 0, %s163
      %s167 = sphi 0, %s166
      %s183 = sphi 0, %s167
    $region4: #{tpu_custom_call.1} parent=1 // loop_header_branch
      %20 = sbr.rel (%p18) target = $region8
    $region5: #{tpu_custom_call.1} parent=1 // loop_body
      %s22 = ssub.s32 %s17, 1
      %s23 = ssub.s32 %s17, 2
      %s24 = sadd.s32 %s17, 1
      %s25 = ssub.s32 %s17, %s24
      %p26 = scmp.eq.s32.totalorder %s25, 0
      %s28 = sadd.s32 %s27, 1
      %s29 = scalar_select %p26, %s27, %s28
      %p32 = pneg %p26
      %p33 = scmp.eq.s32.totalorder %s17, 3
      %p34 = por %p32, %p33
      %p35 = scmp.ne.s32.totalorder %s27, %s30
      %p36 = scmp.eq.s32.totalorder %s17, 0
      %p37 = por %p35, %p36
      %p38 = scmp.ne.s32.totalorder %s27, %s30
      %p39 = scmp.eq.s32.totalorder %s22, 3
      %p40 = por %p38, %p39
      %p41 = scmp.ne.s32.totalorder %s30, %s31
      %p42 = scmp.eq.s32.totalorder %s22, 0
      %p43 = por %p41, %p42
      %p44 = scmp.ne.s32.totalorder %s30, %s31
      %p45 = scmp.eq.s32.totalorder %s23, 3
      %p46 = por %p44, %p45
      %p48 = scmp.ne.s32.totalorder %s31, %s47
      %p49 = scmp.eq.s32.totalorder %s23, 0
      %p50 = por %p48, %p49
      %s52 = sadd.s32 %s51, 1
      %p55 = scmp.eq.s32.totalorder %s17, 3
      %p56 = scmp.ne.s32.totalorder %s51, %s53
      %p57 = scmp.eq.s32.totalorder %s17, 0
      %p58 = por %p56, %p57
      %p59 = scmp.ne.s32.totalorder %s51, %s53
      %p60 = scmp.eq.s32.totalorder %s22, 3
      %p61 = por %p59, %p60
      %p62 = scmp.ne.s32.totalorder %s53, %s54
      %p63 = scmp.eq.s32.totalorder %s22, 0
      %p64 = por %p62, %p63
      %p65 = scmp.ne.s32.totalorder %s53, %s54
      %p66 = scmp.eq.s32.totalorder %s23, 3
      %p67 = por %p65, %p66
      %p69 = scmp.ne.s32.totalorder %s54, %s68
      %p70 = scmp.eq.s32.totalorder %s23, 0
      %p71 = por %p69, %p70
      %s73 = sadd.s32 %s72, 1
      %p76 = scmp.eq.s32.totalorder %s17, 3
      %p77 = scmp.ne.s32.totalorder %s72, %s74
      %p78 = scmp.eq.s32.totalorder %s17, 0
      %p79 = por %p77, %p78
      %p80 = scmp.ne.s32.totalorder %s72, %s74
      %p81 = scmp.eq.s32.totalorder %s22, 3
      %p82 = por %p80, %p81
      %p83 = scmp.ne.s32.totalorder %s74, %s75
      %p84 = scmp.eq.s32.totalorder %s22, 0
      %p85 = por %p83, %p84
      %p86 = scmp.ne.s32.totalorder %s74, %s75
      %p87 = scmp.eq.s32.totalorder %s23, 3
      %p88 = por %p86, %p87
      %p90 = scmp.ne.s32.totalorder %s75, %s89
      %p91 = scmp.eq.s32.totalorder %s23, 0
      %p92 = por %p90, %p91
      %s94 = sadd.s32 %s93, 1
      %p97 = scmp.eq.s32.totalorder %s17, 3
      %p98 = scmp.ne.s32.totalorder %s93, %s95
      %p99 = scmp.eq.s32.totalorder %s17, 0
      %p100 = por %p98, %p99
      %p101 = scmp.ne.s32.totalorder %s93, %s95
      %p102 = scmp.eq.s32.totalorder %s22, 3
      %p103 = por %p101, %p102
      %p104 = scmp.ne.s32.totalorder %s95, %s96
      %p105 = scmp.eq.s32.totalorder %s22, 0
      %p106 = por %p104, %p105
      %p107 = scmp.ne.s32.totalorder %s95, %s96
      %p108 = scmp.eq.s32.totalorder %s23, 3
      %p109 = por %p107, %p108
      %p111 = scmp.ne.s32.totalorder %s96, %s110
      %p112 = scmp.eq.s32.totalorder %s23, 0
      %p113 = por %p111, %p112
      %s115 = sadd.s32 %s114, 1
      %p118 = scmp.eq.s32.totalorder %s17, 3
      %p119 = scmp.ne.s32.totalorder %s114, %s116
      %p120 = scmp.eq.s32.totalorder %s17, 0
      %p121 = por %p119, %p120
      %p122 = scmp.ne.s32.totalorder %s114, %s116
      %p123 = scmp.eq.s32.totalorder %s22, 3
      %p124 = por %p122, %p123
      %p125 = scmp.ne.s32.totalorder %s116, %s117
      %p126 = scmp.eq.s32.totalorder %s22, 0
      %p127 = por %p125, %p126
      %p128 = scmp.ne.s32.totalorder %s116, %s117
      %p129 = scmp.eq.s32.totalorder %s23, 3
      %p130 = por %p128, %p129
      %p132 = scmp.ne.s32.totalorder %s117, %s131
      %p133 = scmp.eq.s32.totalorder %s23, 0
      %p134 = por %p132, %p133
      %s135 = ssub.s32 %s17, %s24
      %p136 = scmp.eq.s32.totalorder %s135, 0
      %s138 = sadd.s32 %s137, 1
      %s139 = scalar_select %p136, %s137, %s138
      %p142 = pneg %p136
      %p143 = scmp.eq.s32.totalorder %s17, 3
      %p144 = por %p142, %p143
      %p145 = scmp.ne.s32.totalorder %s137, %s140
      %p146 = scmp.eq.s32.totalorder %s17, 0
      %p147 = por %p145, %p146
      %p148 = scmp.ne.s32.totalorder %s137, %s140
      %p149 = scmp.eq.s32.totalorder %s22, 3
      %p150 = por %p148, %p149
      %p151 = scmp.ne.s32.totalorder %s140, %s141
      %p152 = scmp.eq.s32.totalorder %s22, 0
      %p153 = por %p151, %p152
      %p154 = scmp.ne.s32.totalorder %s140, %s141
      %p155 = scmp.eq.s32.totalorder %s23, 3
      %p156 = por %p154, %p155
      %p158 = scmp.ne.s32.totalorder %s141, %s157
      %p159 = scmp.eq.s32.totalorder %s23, 0
      %p160 = por %p158, %p159
      %s161 = ssub.s32 %s17, %s24
      %p162 = scmp.eq.s32.totalorder %s161, 0
      %s164 = sadd.s32 %s163, 1
      %s165 = scalar_select %p162, %s163, %s164
      %p168 = pneg %p162
      %p169 = scmp.eq.s32.totalorder %s17, 3
      %p170 = por %p168, %p169
      %p171 = scmp.ne.s32.totalorder %s163, %s166
      %p172 = scmp.eq.s32.totalorder %s17, 0
      %p173 = por %p171, %p172
      %p174 = scmp.ne.s32.totalorder %s163, %s166
      %p175 = scmp.eq.s32.totalorder %s22, 3
      %p176 = por %p174, %p175
      %p177 = scmp.ne.s32.totalorder %s166, %s167
      %p178 = scmp.eq.s32.totalorder %s22, 0
      %p179 = por %p177, %p178
      %p180 = scmp.ne.s32.totalorder %s166, %s167
      %p181 = scmp.eq.s32.totalorder %s23, 3
      %p182 = por %p180, %p181
      %p184 = scmp.ne.s32.totalorder %s167, %s183
      %p185 = scmp.eq.s32.totalorder %s23, 0
      %p186 = por %p184, %p185
      %p187 = scmp.le.s32.totalorder 1, %s17
      %p188 = scmp.lt.s32.totalorder %s17, 5
      %p189 = pnand %p187, %p188
      %p190 = pneg %p189
      // Predicated region
      $region9: #{tpu_custom_call.1} parent=5 // pred_check
        _
      $region10: #{tpu_custom_call.1} parent=5 // pred_check_branch
        %192 = sbr.rel (%p189) target = $region12
      $region11: #{tpu_custom_call.1} parent=5 // pred_region
        %s193 = ssub.s32 %s17, 1
        // Predicated region
        $region13: #{tpu_custom_call.1} parent=11 // pred_check
          %p194 = pneg %p64
        $region14: #{tpu_custom_call.1} parent=11 // pred_check_branch
          %196 = sbr.rel (%p194) target = $region16
        $region15: #{tpu_custom_call.1} parent=11 // pred_region
          %s198 = ssub.s32 2048, 2048
          %199 = vsyncadd [#allocation5], %s198
          %s200 = sshll.u32 [#allocation4], 4
          %s201 = int_to_ptr.vmem [resolvable:$true] %s200
          %206 = dma.hbm_to_vmem [thread:$0]  %s1, 2048, %s201, [#allocation5], 64, 64, 4
        $region16: #{tpu_custom_call.1} parent=11 // pred_fallthru
          _
        // Predicated region
        $region17: #{tpu_custom_call.1} parent=11 // pred_check
          %p207 = pneg %p85
        $region18: #{tpu_custom_call.1} parent=11 // pred_check_branch
          %209 = sbr.rel (%p207) target = $region20
        $region19: #{tpu_custom_call.1} parent=11 // pred_region
          _
        $region20: #{tpu_custom_call.1} parent=11 // pred_fallthru
          _
        // Predicated region
        $region21: #{tpu_custom_call.1} parent=11 // pred_check
          %p210 = pneg %p106
        $region22: #{tpu_custom_call.1} parent=11 // pred_check_branch
          %212 = sbr.rel (%p210) target = $region24
        $region23: #{tpu_custom_call.1} parent=11 // pred_region
          %s214 = ssub.s32 1024, 1024
          %215 = vsyncadd [#allocation5], %s214
          %s216 = sshll.u32 [#allocation6], 4
          %s217 = int_to_ptr.vmem [resolvable:$true] %s216
          %222 = dma.hbm_to_vmem [thread:$0]  %s3, 1024, %s217, [#allocation5], 64, 64, 4
        $region24: #{tpu_custom_call.1} parent=11 // pred_fallthru
          _
        // Predicated region
        $region25: #{tpu_custom_call.1} parent=11 // pred_check
          %p223 = pneg %p127
        $region26: #{tpu_custom_call.1} parent=11 // pred_check_branch
          %225 = sbr.rel (%p223) target = $region28
        $region27: #{tpu_custom_call.1} parent=11 // pred_region
          _
        $region28: #{tpu_custom_call.1} parent=11 // pred_fallthru
          _
      $region12: #{tpu_custom_call.1} parent=5 // pred_fallthru
        _
      %p226 = scmp.lt.s32.totalorder %s17, 4
      // Predicated region
      $region29: #{tpu_custom_call.1} parent=5 // pred_check
        %p227 = pneg %p226
      $region30: #{tpu_custom_call.1} parent=5 // pred_check_branch
        %229 = sbr.rel (%p227) target = $region32
      $region31: #{tpu_custom_call.1} parent=5 // pred_region
        // Predicated region
        $region33: #{tpu_custom_call.1} parent=31 // pred_check
          %p230 = pneg %p37
        $region34: #{tpu_custom_call.1} parent=31 // pred_check_branch
          %232 = sbr.rel (%p230) target = $region36
        $region35: #{tpu_custom_call.1} parent=31 // pred_region
          %s233 = sand.u32 %s27, 1
          %s234 = scalar_lea.sflag [#allocation3], %s233
          %s235 = sand.u32 %s27, 1
          %s236 = smul.addr %s235, 32
          %s237 = scalar_lea.vmem [#allocation2], %s236
          %s238 = smul.u32 2, %s17
          %s240 = ssub.s32 512, 512
          %241 = vsyncadd %s234, %s240
          %s242 = smul.addr %s238, 2
          %s243 = smul.addr %s242, 128
          %s244 = scalar_lea.hbm %s0, %s243
          %s245 = sshll.u32 %s237, 4
          %s246 = int_to_ptr.vmem [resolvable:$true] %s245
          %251 = dma.hbm_to_vmem [thread:$0]  %s244, 512, %s246, %s234, 256, 256, 16
        $region36: #{tpu_custom_call.1} parent=31 // pred_fallthru
          _
      $region32: #{tpu_custom_call.1} parent=5 // pred_fallthru
        _
      %p252 = scmp.le.s32.totalorder 1, %s17
      %p253 = scmp.lt.s32.totalorder %s17, 5
      %p254 = pnand %p252, %p253
      %p255 = pneg %p254
      // Predicated region
      $region37: #{tpu_custom_call.1} parent=5 // pred_check
        _
      $region38: #{tpu_custom_call.1} parent=5 // pred_check_branch
        %257 = sbr.rel (%p254) target = $region40
      $region39: #{tpu_custom_call.1} parent=5 // pred_region
        %s258 = ssub.s32 %s17, 1
        %s259 = sand.u32 %s30, 1
        %s260 = scalar_lea.sflag [#allocation3], %s259
        %s261 = sand.u32 %s30, 1
        %s262 = smul.addr %s261, 32
        %s263 = scalar_lea.vmem [#allocation2], %s262
        // Predicated region
        $region41: #{tpu_custom_call.1} parent=39 // pred_check
          %p264 = pneg %p43
        $region42: #{tpu_custom_call.1} parent=39 // pred_check_branch
          %266 = sbr.rel (%p264) target = $region44
        $region43: #{tpu_custom_call.1} parent=39 // pred_region
          %267 = dma.done %s260, 512
        $region44: #{tpu_custom_call.1} parent=39 // pred_fallthru
          _
        // Predicated region
        $region45: #{tpu_custom_call.1} parent=39 // pred_check
          %p268 = pneg %p64
        $region46: #{tpu_custom_call.1} parent=39 // pred_check_branch
          %270 = sbr.rel (%p268) target = $region48
        $region47: #{tpu_custom_call.1} parent=39 // pred_region
          %271 = dma.done [#allocation5], 2048
        $region48: #{tpu_custom_call.1} parent=39 // pred_fallthru
          _
        // Predicated region
        $region49: #{tpu_custom_call.1} parent=39 // pred_check
          %p272 = pneg %p106
        $region50: #{tpu_custom_call.1} parent=39 // pred_check_branch
          %274 = sbr.rel (%p272) target = $region52
        $region51: #{tpu_custom_call.1} parent=39 // pred_region
          %275 = dma.done [#allocation5], 1024
        $region52: #{tpu_custom_call.1} parent=39 // pred_fallthru
          _
        %s276 = sand.u32 %s30, 1
        %s277 = scalar_lea.sflag [#allocation3], %s276
        %s278 = sand.u32 %s30, 1
        %s279 = smul.addr %s278, 32
        %s280 = scalar_lea.vmem [#allocation2], %s279
        %p281 = pneg %p43
        %p282 = pneg %p40
        %p283 = pneg %p64
        %p284 = pneg %p61
        %p285 = pneg %p85
        %p286 = pneg %p82
        %p287 = pneg %p106
        %p288 = pneg %p103
        %p289 = pneg %p127
        %p290 = pneg %p124
        %p291 = pneg %p153
        %p292 = pneg %p150
        %s293 = smul.u32 2, %s22
        %p294 = scmp.lt.s32.totalorder %s293, 7
        %s295 = scalar_select %p294, %s293, 7
        %s296 = smul.addr %s295, 8
        %s297 = scalar_lea.vmem %s5, %s296
        %p298 = pneg %p179
        %p299 = pneg %p176
        %s300 = smul.u32 2, %s22
        %p301 = scmp.lt.s32.totalorder %s300, 7
        %s302 = scalar_select %p301, %s300, 7
        %s303 = smul.addr %s302, 8
        %s304 = scalar_lea.vmem %s6, %s303
        %s305 = smul.u32 2, %s22
        %s306 = smul.u32 2, %s22
        %p307 = scmp.lt.s32.totalorder %s306, 7
        %s308 = scalar_select %p307, %s306, 7
        %s309 = smul.addr %s308, 8
        %s310 = scalar_lea.vmem %s5, %s309
        %s311 = smul.u32 2, %s22
        %s312 = smul.u32 2, %s22
        %p313 = scmp.lt.s32.totalorder %s312, 7
        %s314 = scalar_select %p313, %s312, 7
        %s315 = smul.addr %s314, 8
        %s316 = scalar_lea.vmem %s6, %s315
        %s317 = smul.u32 2, %s22
        %v319 = vld [vmem:[%s263] sm:$0xff]
        %v320 = vld [vmem:[%s263 + $0x8] sm:$0xff]
        %v321 = vld [vmem:[%s263 + $0x10] sm:$0xff]
        %v322 = vld [vmem:[%s263 + $0x18] sm:$0xff]
        %vm323 = vcmp.gt.f32.partialorder %v319, 0.0
        %vm324 = vcmp.gt.f32.partialorder %v320, 0.0
        %vm325 = vcmp.gt.f32.partialorder %v321, 0.0
        %vm326 = vcmp.gt.f32.partialorder %v322, 0.0
        %v327 = vmul.f32 %v319, 0.1
        %v328 = vmul.f32 %v320, 0.1
        %v329 = vmul.f32 %v321, 0.1
        %v330 = vmul.f32 %v322, 0.1
        %v331 = vsel %vm323, %v319, %v327
        %v332 = vsel %vm324, %v320, %v328
        %v333 = vsel %vm325, %v321, %v329
        %v334 = vsel %vm326, %v322, %v330
        %v335 = vpack.c.bf16 %v333, %v331
        %v336 = vpack.c.bf16 %v334, %v332
        %v337 = vld [vmem:[#allocation4] sm:$0xf]
        %v338 = vld [vmem:[#allocation4 + $0x4] sm:$0xf]
        %v339 = vld [vmem:[#allocation4 + $0x8] sm:$0xf]
        %v340 = vld [vmem:[#allocation4 + $0xc] sm:$0xf]
        %v341 = vld [vmem:[#allocation4 + $0x10] sm:$0xf]
        %v342 = vld [vmem:[#allocation4 + $0x14] sm:$0xf]
        %v343 = vld [vmem:[#allocation4 + $0x18] sm:$0xf]
        %v344 = vld [vmem:[#allocation4 + $0x1c] sm:$0xf]
        %v345 = vld [vmem:[#allocation4 + $0x20] sm:$0xf]
        %v346 = vld [vmem:[#allocation4 + $0x24] sm:$0xf]
        %v347 = vld [vmem:[#allocation4 + $0x28] sm:$0xf]
        %v348 = vld [vmem:[#allocation4 + $0x2c] sm:$0xf]
        %v349 = vld [vmem:[#allocation4 + $0x30] sm:$0xf]
        %v350 = vld [vmem:[#allocation4 + $0x34] sm:$0xf]
        %v351 = vld [vmem:[#allocation4 + $0x38] sm:$0xf]
        %v352 = vld [vmem:[#allocation4 + $0x3c] sm:$0xf]
        %v353 = vld [vmem:[#allocation4 + $0x40] sm:$0xf]
        %v354 = vld [vmem:[#allocation4 + $0x44] sm:$0xf]
        %v355 = vld [vmem:[#allocation4 + $0x48] sm:$0xf]
        %v356 = vld [vmem:[#allocation4 + $0x4c] sm:$0xf]
        %v357 = vld [vmem:[#allocation4 + $0x50] sm:$0xf]
        %v358 = vld [vmem:[#allocation4 + $0x54] sm:$0xf]
        %v359 = vld [vmem:[#allocation4 + $0x58] sm:$0xf]
        %v360 = vld [vmem:[#allocation4 + $0x5c] sm:$0xf]
        %v361 = vld [vmem:[#allocation4 + $0x60] sm:$0xf]
        %v362 = vld [vmem:[#allocation4 + $0x64] sm:$0xf]
        %v363 = vld [vmem:[#allocation4 + $0x68] sm:$0xf]
        %v364 = vld [vmem:[#allocation4 + $0x6c] sm:$0xf]
        %v365 = vld [vmem:[#allocation4 + $0x70] sm:$0xf]
        %v366 = vld [vmem:[#allocation4 + $0x74] sm:$0xf]
        %v367 = vld [vmem:[#allocation4 + $0x78] sm:$0xf]
        %v368 = vld [vmem:[#allocation4 + $0x7c] sm:$0xf]
        %v369 = vld [vmem:[%s2] sm:$0x1]
        %v371 = vlaneseq
        %v372 = vshrl.u32 %v371, 7
        %v373 = vsub.s32 0, %v372
        %v374 = vrot.slane %v369, %v373
        %v408 = vunpack.c.l.b16 %v337
        %v409 = vunpack.c.l.b16 %v338
        %v410 = vunpack.c.l.b16 %v339
        %v411 = vunpack.c.l.b16 %v340
        %v412 = vunpack.c.l.b16 %v341
        %v413 = vunpack.c.l.b16 %v342
        %v414 = vunpack.c.l.b16 %v343
        %v415 = vunpack.c.l.b16 %v344
        %v416 = vunpack.c.l.b16 %v345
        %v417 = vunpack.c.l.b16 %v346
        %v418 = vunpack.c.l.b16 %v347
        %v419 = vunpack.c.l.b16 %v348
        %v420 = vunpack.c.l.b16 %v349
        %v421 = vunpack.c.l.b16 %v350
        %v422 = vunpack.c.l.b16 %v351
        %v423 = vunpack.c.l.b16 %v352
        %v424 = vunpack.c.l.b16 %v353
        %v425 = vunpack.c.l.b16 %v354
        %v426 = vunpack.c.l.b16 %v355
        %v427 = vunpack.c.l.b16 %v356
        %v428 = vunpack.c.l.b16 %v357
        %v429 = vunpack.c.l.b16 %v358
        %v430 = vunpack.c.l.b16 %v359
        %v431 = vunpack.c.l.b16 %v360
        %v432 = vunpack.c.l.b16 %v361
        %v433 = vunpack.c.l.b16 %v362
        %v434 = vunpack.c.l.b16 %v363
        %v435 = vunpack.c.l.b16 %v364
        %v436 = vunpack.c.l.b16 %v365
        %v437 = vunpack.c.l.b16 %v366
        %v438 = vunpack.c.l.b16 %v367
        %v439 = vunpack.c.l.b16 %v368
        %v440 = vpack.c.b16 %v409, %v408
        %v441 = vpack.c.b16 %v411, %v410
        %v442 = vpack.c.b16 %v413, %v412
        %v443 = vpack.c.b16 %v415, %v414
        %v444 = vpack.c.b16 %v417, %v416
        %v445 = vpack.c.b16 %v419, %v418
        %v446 = vpack.c.b16 %v421, %v420
        %v447 = vpack.c.b16 %v423, %v422
        %v448 = vpack.c.b16 %v425, %v424
        %v449 = vpack.c.b16 %v427, %v426
        %v450 = vpack.c.b16 %v429, %v428
        %v451 = vpack.c.b16 %v431, %v430
        %v452 = vpack.c.b16 %v433, %v432
        %v453 = vpack.c.b16 %v435, %v434
        %v454 = vpack.c.b16 %v437, %v436
        %v455 = vpack.c.b16 %v439, %v438
        %472 = vmatprep.subr.bf16.mxu0 0
        %473 = vmatpush1.bf16.msra.mxu0 %v440
        %474 = vmatprep.subr.bf16.mxu0 0
        %475 = vmatpush1.bf16.msra.mxu0 %v441
        %476 = vmatprep.subr.bf16.mxu0 0
        %477 = vmatpush1.bf16.msra.mxu0 %v442
        %478 = vmatprep.subr.bf16.mxu0 0
        %479 = vmatpush1.bf16.msra.mxu0 %v443
        %480 = vmatprep.subr.bf16.mxu0 0
        %481 = vmatpush1.bf16.msra.mxu0 %v444
        %482 = vmatprep.subr.bf16.mxu0 0
        %483 = vmatpush1.bf16.msra.mxu0 %v445
        %484 = vmatprep.subr.bf16.mxu0 0
        %485 = vmatpush1.bf16.msra.mxu0 %v446
        %486 = vmatprep.subr.bf16.mxu0 0
        %487 = vmatpush1.bf16.msra.mxu0 %v447
        %488 = vmatprep.subr.bf16.mxu0 0
        %489 = vmatpush1.bf16.msra.mxu0 %v448
        %490 = vmatprep.subr.bf16.mxu0 0
        %491 = vmatpush1.bf16.msra.mxu0 %v449
        %492 = vmatprep.subr.bf16.mxu0 0
        %493 = vmatpush1.bf16.msra.mxu0 %v450
        %494 = vmatprep.subr.bf16.mxu0 0
        %495 = vmatpush1.bf16.msra.mxu0 %v451
        %496 = vmatprep.subr.bf16.mxu0 0
        %497 = vmatpush1.bf16.msra.mxu0 %v452
        %498 = vmatprep.subr.bf16.mxu0 0
        %499 = vmatpush1.bf16.msra.mxu0 %v453
        %500 = vmatprep.subr.bf16.mxu0 0
        %501 = vmatpush1.bf16.msra.mxu0 %v454
        %502 = vmatprep.subr.bf16.mxu0 0
        %503 = vmatpush1.bf16.msra.mxu0 %v455
        %504 = vmatprep.mubr.bf16.mxu0 %v336
        %505 = vmatmul.mubr.bf16.gmra.mrb[0].mxu0 %v335
        %v506 = vpop.f32.mrb[0].mxu0
        %v507 = vadd.f32 %v374, %v506
        %v508 = vpop.f32.mrb[0].mxu0
        %v509 = vpop.f32.mrb[0].mxu0
        %v510 = vadd.f32 %v374, %v509
        %v511 = vpop.f32.mrb[0].mxu0
        %512 = vdwg.mxu0
        %vm513 = vcmp.gt.f32.partialorder %v507, 0.0
        %vm514 = vcmp.gt.f32.partialorder %v510, 0.0
        %v515 = vmul.f32 %v507, 0.1
        %v516 = vmul.f32 %v510, 0.1
        %v517 = vsel %vm513, %v507, %v515
        %v518 = vsel %vm514, %v510, %v516
        %v519 = vpack.c.bf16 %v518, %v517
        %v520 = vld [vmem:[#allocation6] sm:$0xf]
        %v521 = vld [vmem:[#allocation6 + $0x4] sm:$0xf]
        %v522 = vld [vmem:[#allocation6 + $0x8] sm:$0xf]
        %v523 = vld [vmem:[#allocation6 + $0xc] sm:$0xf]
        %v524 = vld [vmem:[#allocation6 + $0x10] sm:$0xf]
        %v525 = vld [vmem:[#allocation6 + $0x14] sm:$0xf]
        %v526 = vld [vmem:[#allocation6 + $0x18] sm:$0xf]
        %v527 = vld [vmem:[#allocation6 + $0x1c] sm:$0xf]
        %v528 = vld [vmem:[#allocation6 + $0x20] sm:$0xf]
        %v529 = vld [vmem:[#allocation6 + $0x24] sm:$0xf]
        %v530 = vld [vmem:[#allocation6 + $0x28] sm:$0xf]
        %v531 = vld [vmem:[#allocation6 + $0x2c] sm:$0xf]
        %v532 = vld [vmem:[#allocation6 + $0x30] sm:$0xf]
        %v533 = vld [vmem:[#allocation6 + $0x34] sm:$0xf]
        %v534 = vld [vmem:[#allocation6 + $0x38] sm:$0xf]
        %v535 = vld [vmem:[#allocation6 + $0x3c] sm:$0xf]
        %v536 = vld [vmem:[%s4] sm:$0x1]
        %v538 = vlaneseq
        %v539 = vshrl.u32 %v538, 7
        %v540 = vsub.s32 0, %v539
        %v541 = vrot.slane %v536, %v540
        %v559 = vunpack.c.l.b16 %v520
        %v560 = vunpack.c.l.b16 %v521
        %v561 = vunpack.c.l.b16 %v522
        %v562 = vunpack.c.l.b16 %v523
        %v563 = vunpack.c.l.b16 %v524
        %v564 = vunpack.c.l.b16 %v525
        %v565 = vunpack.c.l.b16 %v526
        %v566 = vunpack.c.l.b16 %v527
        %v567 = vunpack.c.l.b16 %v528
        %v568 = vunpack.c.l.b16 %v529
        %v569 = vunpack.c.l.b16 %v530
        %v570 = vunpack.c.l.b16 %v531
        %v571 = vunpack.c.l.b16 %v532
        %v572 = vunpack.c.l.b16 %v533
        %v573 = vunpack.c.l.b16 %v534
        %v574 = vunpack.c.l.b16 %v535
        %v575 = vpack.c.b16 %v560, %v559
        %v576 = vpack.c.b16 %v562, %v561
        %v577 = vpack.c.b16 %v564, %v563
        %v578 = vpack.c.b16 %v566, %v565
        %v579 = vpack.c.b16 %v568, %v567
        %v580 = vpack.c.b16 %v570, %v569
        %v581 = vpack.c.b16 %v572, %v571
        %v582 = vpack.c.b16 %v574, %v573
        %591 = vmatprep.subr.bf16.mxu0 0
        %592 = vmatpush1.bf16.msra.mxu0 %v575
        %593 = vmatprep.subr.bf16.mxu0 0
        %594 = vmatpush1.bf16.msra.mxu0 %v576
        %595 = vmatprep.subr.bf16.mxu0 0
        %596 = vmatpush1.bf16.msra.mxu0 %v577
        %597 = vmatprep.subr.bf16.mxu0 0
        %598 = vmatpush1.bf16.msra.mxu0 %v578
        %599 = vmatprep.subr.bf16.mxu0 0
        %600 = vmatpush1.bf16.msra.mxu0 %v579
        %601 = vmatprep.subr.bf16.mxu0 0
        %602 = vmatpush1.bf16.msra.mxu0 %v580
        %603 = vmatprep.subr.bf16.mxu0 0
        %604 = vmatpush1.bf16.msra.mxu0 %v581
        %605 = vmatprep.subr.bf16.mxu0 0
        %606 = vmatpush1.bf16.msra.mxu0 %v582
        %607 = vmatprep.subr.bf16.mxu0 0
        %608 = vmatpush1.bf16.msra.mxu0 0
        %609 = vmatprep.subr.bf16.mxu0 0
        %610 = vmatpush1.bf16.msra.mxu0 0
        %611 = vmatprep.subr.bf16.mxu0 0
        %612 = vmatpush1.bf16.msra.mxu0 0
        %613 = vmatprep.subr.bf16.mxu0 0
        %614 = vmatpush1.bf16.msra.mxu0 0
        %615 = vmatprep.subr.bf16.mxu0 0
        %616 = vmatpush1.bf16.msra.mxu0 0
        %617 = vmatprep.subr.bf16.mxu0 0
        %618 = vmatpush1.bf16.msra.mxu0 0
        %619 = vmatprep.subr.bf16.mxu0 0
        %620 = vmatpush1.bf16.msra.mxu0 0
        %621 = vmatprep.subr.bf16.mxu0 0
        %622 = vmatpush1.bf16.msra.mxu0 0
        %623 = vmatprep.mubr.bf16.mxu0 0
        %624 = vmatmul.mubr.bf16.gmra.mrb[0].mxu0 %v519
        %v625 = vpop.f32.mrb[0].mxu0
        %v626 = vadd.f32 %v541, %v625
        %v627 = vpop.f32.mrb[0].mxu0
        %v628 = vpop.f32.mrb[0].mxu0
        %v629 = vadd.f32 %v541, %v628
        %v630 = vpop.f32.mrb[0].mxu0
        %631 = vdwg.mxu0
        %v632 = vlaneseq
        %v633 = vand.u32 %v632, 127
        %vm634 = vcmp.lt.s32.totalorder %v633, 2
        %vm635 = vcmp.ge.s32.totalorder %v633, 2
        %vm636 = vcmp.lt.s32.totalorder %v633, 12
        %vm637 = vmand %vm635, %vm636
        %v638 = vsel %vm634, %v626, -1e+30
        %v639 = vsel %vm634, %v629, -1e+30
        %640 = vmax.xlane.f32.xlu0 %v638
        %v641 = vpop.xlane.xlu0 %640
        %642 = vmax.xlane.f32.xlu0 %v639
        %v643 = vpop.xlane.xlu0 %642
        %v644 = vsel %vm637, %v626, -1e+30
        %v645 = vsel %vm637, %v629, -1e+30
        %646 = vmax.xlane.f32.xlu0 %v644
        %v647 = vpop.xlane.xlu0 %646
        %648 = vmax.xlane.f32.xlu0 %v645
        %v649 = vpop.xlane.xlu0 %648
        %v650 = vsel %vm634, %v641, %v647
        %v651 = vsel %vm634, %v643, %v649
        %v652 = vsub.f32 %v626, %v650
        %v653 = vsub.f32 %v629, %v651
        %v654 = vmul.f32 %v652, 1.442695
        %v655 = vpow.pop %v654
        %v656 = vmul.f32 %v653, 1.442695
        %v657 = vpow.pop %v656
        %v658 = vsel %vm634, %v655, 0.0
        %v659 = vsel %vm634, %v657, 0.0
        %660 = vadd.xlane.f32.xlu0 %v658
        %v661 = vpop.xlane.xlu0 %660
        %662 = vadd.xlane.f32.xlu0 %v659
        %v663 = vpop.xlane.xlu0 %662
        %v664 = vsel %vm637, %v655, 0.0
        %v665 = vsel %vm637, %v657, 0.0
        %666 = vadd.xlane.f32.xlu0 %v664
        %v667 = vpop.xlane.xlu0 %666
        %668 = vadd.xlane.f32.xlu0 %v665
        %v669 = vpop.xlane.xlu0 %668
        %v670 = vlog2.pop %v661
        %v671 = vmul.f32 %v670, 0.6931472
        %v672 = vlog2.pop %v663
        %v673 = vmul.f32 %v672, 0.6931472
        %v674 = vlog2.pop %v667
        %v675 = vmul.f32 %v674, 0.6931472
        %v676 = vlog2.pop %v669
        %v677 = vmul.f32 %v676, 0.6931472
        %v678 = vsel %vm634, %v671, %v675
        %v679 = vsel %vm634, %v673, %v677
        %v680 = vsub.f32 %v652, %v678
        %v681 = vsub.f32 %v653, %v679
        %vm682 = vcmask 15360
        %683 = vst.msk [vmem:[%s310] sm:$0xff] %vm682, %v680
        %684 = vst.msk [vmem:[%s310 + $0x8] sm:$0xff] %vm682, %v681
        %687 = vrot.lane.b32.xlu0 %v680, 126
        %v688 = vpop.permute.xlu0 %687
        %689 = vrot.lane.b32.xlu0 %v681, 126
        %v690 = vpop.permute.xlu0 %689
        %vm693 = vcmask 80896
        %694 = vst.msk [vmem:[%s316] sm:$0xff] %vm693, %v688
        %695 = vst.msk [vmem:[%s316 + $0x8] sm:$0xff] %vm693, %v690
        %s696 = smul.u32 2, %s22
        %p697 = scmp.lt.s32.totalorder %s696, 7
        %s698 = scalar_select %p697, %s696, 7
        %s699 = smul.addr %s698, 8
        %s700 = scalar_lea.vmem %s5, %s699
        %s701 = smul.u32 2, %s22
        %p702 = scmp.lt.s32.totalorder %s701, 7
        %s703 = scalar_select %p702, %s701, 7
        %s704 = smul.addr %s703, 8
        %s705 = scalar_lea.vmem %s6, %s704
        // Predicated region
        $region53: #{tpu_custom_call.1} parent=39 // pred_check
          %p706 = pneg %p150
        $region54: #{tpu_custom_call.1} parent=39 // pred_check_branch
          %708 = sbr.rel (%p706) target = $region56
        $region55: #{tpu_custom_call.1} parent=39 // pred_region
          %s709 = smul.u32 2, %s22
        $region56: #{tpu_custom_call.1} parent=39 // pred_fallthru
          _
        // Predicated region
        $region57: #{tpu_custom_call.1} parent=39 // pred_check
          %p710 = pneg %p176
        $region58: #{tpu_custom_call.1} parent=39 // pred_check_branch
          %712 = sbr.rel (%p710) target = $region60
        $region59: #{tpu_custom_call.1} parent=39 // pred_region
          %s713 = smul.u32 2, %s22
        $region60: #{tpu_custom_call.1} parent=39 // pred_fallthru
          _
      $region40: #{tpu_custom_call.1} parent=5 // pred_fallthru
        _
      %p714 = scmp.le.s32.totalorder 2, %s17
      // Predicated region
      $region61: #{tpu_custom_call.1} parent=5 // pred_check
        %p715 = pneg %p714
      $region62: #{tpu_custom_call.1} parent=5 // pred_check_branch
        %717 = sbr.rel (%p715) target = $region64
      $region63: #{tpu_custom_call.1} parent=5 // pred_region
        %s718 = ssub.s32 %s17, 2
        // Predicated region
        $region65: #{tpu_custom_call.1} parent=63 // pred_check
          %p719 = pneg %p156
        $region66: #{tpu_custom_call.1} parent=63 // pred_check_branch
          %721 = sbr.rel (%p719) target = $region68
        $region67: #{tpu_custom_call.1} parent=63 // pred_region
          %s722 = smul.u32 2, %s23
          %p723 = scmp.lt.s32.totalorder %s722, 7
          %s724 = scalar_select %p723, %s722, 7
          %s725 = smul.addr %s724, 8
          %s726 = scalar_lea.vmem %s5, %s725
        $region68: #{tpu_custom_call.1} parent=63 // pred_fallthru
          _
        // Predicated region
        $region69: #{tpu_custom_call.1} parent=63 // pred_check
          %p727 = pneg %p182
        $region70: #{tpu_custom_call.1} parent=63 // pred_check_branch
          %729 = sbr.rel (%p727) target = $region72
        $region71: #{tpu_custom_call.1} parent=63 // pred_region
          %s730 = smul.u32 2, %s23
          %p731 = scmp.lt.s32.totalorder %s730, 7
          %s732 = scalar_select %p731, %s730, 7
          %s733 = smul.addr %s732, 8
          %s734 = scalar_lea.vmem %s6, %s733
        $region72: #{tpu_custom_call.1} parent=63 // pred_fallthru
          _
      $region64: #{tpu_custom_call.1} parent=5 // pred_fallthru
        _
    $region6: #{tpu_custom_call.1} parent=1 // loop_footer
      %s21 = sadd.s32 1, %s17
    $region7: #{tpu_custom_call.1} parent=1 // loop_footer_branch
      %16 = sbr.rel target = $region3
    $region8: #{tpu_custom_call.1} parent=1 // loop_exit
      _
    %735 = vsyncpa [#allocation3], 1
    %s736 = scalar_lea.sflag [#allocation3], 1
    %737 = vsyncpa %s736, 1
    %738 = vsyncpa [#allocation5], 1

</llo_original>
